<compile_context>
chip_gen: v6e
topology: v6e:2x2x1
jax: 0.10.0
libtpu: 0.0.40
codegen_flags: <defaults>
</compile_context>

<pallas_src>
import jax
import jax.numpy as jnp
from jax import lax
from jax.experimental import pallas as pl
from jax.experimental.pallas import tpu as pltpu

IN_F = 28 * 28          # 784
H1 = IN_F // 4          # 196
H2 = H1 // 4            # 49
NUM_CLASSES = 10

# Lane-dense padded sizes (multiples of 128; padding is zeros, applied at init).
H1_PAD = 256
H2_PAD = 128
OUT_PAD = 128


# ------------------------------ kernel -------------------------------------- #

def mlp_softmax_kernel(x_ref, w1_ref, b1_ref, w2_ref, b2_ref, w3_ref, b3_ref,
                       o_ref):
    """Fused Linear->ReLU->Linear->ReLU->Linear->Softmax for the whole batch.

    x_ref : (B, 784)
    w1/b1 : (784, 256) / (1, 256)   -- cols >=196 are zero
    w2/b2 : (256, 128) / (1, 128)   -- rows >=196 and cols >=49 are zero
    w3/b3 : (128, 128) / (1, 128)   -- rows >=49  and cols >=10 are zero
    o_ref : (B, 10)
    """
    x = x_ref[...].astype(jnp.float32)

    h1 = jnp.dot(x, w1_ref[...], preferred_element_type=jnp.float32) + b1_ref[...]
    h1 = jnp.maximum(h1, 0.0)                                   # (B, 256); pad lanes == 0

    h2 = jnp.dot(h1, w2_ref[...], preferred_element_type=jnp.float32) + b2_ref[...]
    h2 = jnp.maximum(h2, 0.0)                                   # (B, 128); pad lanes == 0

    logits = jnp.dot(h2, w3_ref[...], preferred_element_type=jnp.float32) \
        + b3_ref[...]                                           # (B, 128)

    # Mask padded class lanes so they receive zero probability.
    lane = lax.broadcasted_iota(jnp.int32, logits.shape, dimension=1)
    logits = jnp.where(lane < NUM_CLASSES, logits, jnp.float32(-1e30))

    m = jnp.max(logits, axis=-1, keepdims=True)
    e = jnp.exp(logits - m)
    s = jnp.sum(e, axis=-1, keepdims=True)
    probs = e * pl.reciprocal(s, approx=True)                   # EUP, not VPU divide

    o_ref[...] = probs[:, :NUM_CLASSES].astype(o_ref.dtype)


# ------------------------------ wrapper -------------------------------------- #

def mlp_forward(x, params):
    """x: (B, 784) float32 (already flattened, as in the PyTorch training loop)."""
    B = x.shape[0]
    w1, b1 = params["w1"], params["b1"]
    w2, b2 = params["w2"], params["b2"]
    w3, b3 = params["w3"], params["b3"]

    in_specs = [
        pl.BlockSpec(x.shape, lambda i: (0, 0)),
        pl.BlockSpec(w1.shape, lambda i: (0, 0)),
        pl.BlockSpec(b1.shape, lambda i: (0, 0)),
        pl.BlockSpec(w2.shape, lambda i: (0, 0)),
        pl.BlockSpec(b2.shape, lambda i: (0, 0)),
        pl.BlockSpec(w3.shape, lambda i: (0, 0)),
        pl.BlockSpec(b3.shape, lambda i: (0, 0)),
    ]
    return pl.pallas_call(
        mlp_softmax_kernel,
        out_shape=jax.ShapeDtypeStruct((B, NUM_CLASSES), jnp.float32),
        grid=(1,),
        in_specs=in_specs,
        out_specs=pl.BlockSpec((B, NUM_CLASSES), lambda i: (0, 0)),
        compiler_params=pltpu.CompilerParams(
            dimension_semantics=("arbitrary",)),
    )(x, w1, b1, w2, b2, w3, b3)


# ----------------------------- parameters ------------------------------------ #

def init_params(key):
    """Real (unpadded) weights, matching nn.Linear's U(-1/sqrt(fin), 1/sqrt(fin))."""
    ks = jax.random.split(key, 6)

    def linear(kw, kb, fin, fout):
        bound = 1.0 / jnp.sqrt(jnp.float32(fin))
        w = jax.random.uniform(kw, (fin, fout), jnp.float32, -bound, bound)
        b = jax.random.uniform(kb, (1, fout), jnp.float32, -bound, bound)
        return w, b

    w1, b1 = linear(ks[0], ks[1], IN_F, H1)
    w2, b2 = linear(ks[2], ks[3], H1, H2)
    w3, b3 = linear(ks[4], ks[5], H2, NUM_CLASSES)
    return dict(w1=w1, b1=b1, w2=w2, b2=b2, w3=w3, b3=b3)


def pad_params(p):
    """Zero-pad hidden/output dims to lane-dense multiples of 128 (done once,
    off the hot path). Padded lanes stay exactly zero through bias+ReLU and are
    masked out of the softmax inside the kernel, so semantics are unchanged."""
    def pad(a, rows, cols):
        return jnp.pad(a, ((0, rows - a.shape[0]), (0, cols - a.shape[1])))
    return dict(
        w1=pad(p["w1"], IN_F, H1_PAD),    b1=pad(p["b1"], 1, H1_PAD),
        w2=pad(p["w2"], H1_PAD, H2_PAD),  b2=pad(p["b2"], 1, H2_PAD),
        w3=pad(p["w3"], H2_PAD, OUT_PAD), b3=pad(p["b3"], 1, OUT_PAD),
    )


def mlp_reference(x, p):
    """Pure-JAX reference of the PyTorch Mlp.forward (unpadded weights)."""
    h1 = jnp.maximum(x @ p["w1"] + p["b1"], 0.0)
    h2 = jnp.maximum(h1 @ p["w2"] + p["b2"], 0.0)
    logits = h2 @ p["w3"] + p["b3"]
    return jax.nn.softmax(logits, axis=-1)


# -------------------------------- main ---------------------------------------- #

if __name__ == "__main__":
    key = jax.random.PRNGKey(0)
    k_x, k_p = jax.random.split(key)

    params = init_params(k_p)
    padded = pad_params(params)

    B = 2
    # Matches the PyTorch usage: x.reshape(-1, 1*28*28)
    x = jax.random.normal(k_x, (B, IN_F), jnp.float32)

    fwd = jax.jit(mlp_forward)
    y = jax.block_until_ready(fwd(x, padded))

    assert y.shape == (B, NUM_CLASSES)
    assert bool(jnp.all(jnp.isfinite(y)))
    # softmax rows sum to 1 (approx=True reciprocal -> ~2^-12 relative error)
    assert bool(jnp.allclose(jnp.sum(y, axis=-1), 1.0, atol=1e-3))

    y_ref = mlp_reference(x, params)
    assert bool(jnp.allclose(y, y_ref, atol=1e-3, rtol=1e-3))

    print("KERNEL_OK")
</pallas_src>

<mosaic_0001>
module attributes {stable_mosaic.version = 11 : i64} {
  func.func @mlp_softmax_kernel(%arg0: i32, %arg1: memref<2x784xf32, #tpu.memory_space<vmem>>, %arg2: memref<784x256xf32, #tpu.memory_space<vmem>>, %arg3: memref<1x256xf32, #tpu.memory_space<vmem>>, %arg4: memref<256x128xf32, #tpu.memory_space<vmem>>, %arg5: memref<1x128xf32, #tpu.memory_space<vmem>>, %arg6: memref<128x128xf32, #tpu.memory_space<vmem>>, %arg7: memref<1x128xf32, #tpu.memory_space<vmem>>, %arg8: memref<2x10xf32, #tpu.memory_space<vmem>>) attributes {dimension_semantics = [#tpu.dimension_semantics<arbitrary>], iteration_bounds = array<i64: 1>, scalar_prefetch = 0 : i64, scratch_operands = 0 : i64, tpu.core_type = #tpu.core_type<tc>, window_params = [{pipeline_mode = #tpu.pipeline_mode<synchronous>, transform_indices = @transform_0, window_bounds = array<i64: 2, 784>}, {pipeline_mode = #tpu.pipeline_mode<synchronous>, transform_indices = @transform_1, window_bounds = array<i64: 784, 256>}, {pipeline_mode = #tpu.pipeline_mode<synchronous>, transform_indices = @transform_2, window_bounds = array<i64: 1, 256>}, {pipeline_mode = #tpu.pipeline_mode<synchronous>, transform_indices = @transform_3, window_bounds = array<i64: 256, 128>}, {pipeline_mode = #tpu.pipeline_mode<synchronous>, transform_indices = @transform_4, window_bounds = array<i64: 1, 128>}, {pipeline_mode = #tpu.pipeline_mode<synchronous>, transform_indices = @transform_5, window_bounds = array<i64: 128, 128>}, {pipeline_mode = #tpu.pipeline_mode<synchronous>, transform_indices = @transform_6, window_bounds = array<i64: 1, 128>}, {pipeline_mode = #tpu.pipeline_mode<synchronous>, transform_indices = @transform_7, window_bounds = array<i64: 2, 10>}]} {
    %c0 = arith.constant 0 : index
    %c0_0 = arith.constant 0 : index
    %0 = vector.load %arg1[%c0, %c0_0] : memref<2x784xf32, #tpu.memory_space<vmem>>, vector<2x784xf32>
    %c0_1 = arith.constant 0 : index
    %c0_2 = arith.constant 0 : index
    %1 = vector.load %arg2[%c0_1, %c0_2] : memref<784x256xf32, #tpu.memory_space<vmem>>, vector<784x256xf32>
    %cst = arith.constant dense<0.000000e+00> : vector<2x256xf32>
    %2 = tpu.matmul %0, %1, %cst {dimension_numbers = #tpu.dot_dimension_numbers<[1], [0], [0], [1], [0, 0, 1, 1], [], []>} : vector<2x784xf32>, vector<784x256xf32>, vector<2x256xf32> -> vector<2x256xf32>
    %c0_3 = arith.constant 0 : index
    %c0_4 = arith.constant 0 : index
    %3 = vector.load %arg3[%c0_3, %c0_4] : memref<1x256xf32, #tpu.memory_space<vmem>>, vector<1x256xf32>
    %4 = vector.broadcast %3 : vector<1x256xf32> to vector<2x256xf32>
    %5 = arith.addf %2, %4 : vector<2x256xf32>
    %cst_5 = arith.constant 0.000000e+00 : f32
    %6 = vector.broadcast %cst_5 : f32 to vector<2x256xf32>
    %7 = arith.maximumf %5, %6 : vector<2x256xf32>
    %c0_6 = arith.constant 0 : index
    %c0_7 = arith.constant 0 : index
    %8 = vector.load %arg4[%c0_6, %c0_7] : memref<256x128xf32, #tpu.memory_space<vmem>>, vector<256x128xf32>
    %cst_8 = arith.constant dense<0.000000e+00> : vector<2x128xf32>
    %9 = tpu.matmul %7, %8, %cst_8 {dimension_numbers = #tpu.dot_dimension_numbers<[1], [0], [0], [1], [0, 0, 1, 1], [], []>} : vector<2x256xf32>, vector<256x128xf32>, vector<2x128xf32> -> vector<2x128xf32>
    %c0_9 = arith.constant 0 : index
    %c0_10 = arith.constant 0 : index
    %10 = vector.load %arg5[%c0_9, %c0_10] : memref<1x128xf32, #tpu.memory_space<vmem>>, vector<1x128xf32>
    %11 = vector.broadcast %10 : vector<1x128xf32> to vector<2x128xf32>
    %12 = arith.addf %9, %11 : vector<2x128xf32>
    %cst_11 = arith.constant 0.000000e+00 : f32
    %13 = vector.broadcast %cst_11 : f32 to vector<2x128xf32>
    %14 = arith.maximumf %12, %13 : vector<2x128xf32>
    %c0_12 = arith.constant 0 : index
    %c0_13 = arith.constant 0 : index
    %15 = vector.load %arg6[%c0_12, %c0_13] : memref<128x128xf32, #tpu.memory_space<vmem>>, vector<128x128xf32>
    %cst_14 = arith.constant dense<0.000000e+00> : vector<2x128xf32>
    %16 = tpu.matmul %14, %15, %cst_14 {dimension_numbers = #tpu.dot_dimension_numbers<[1], [0], [0], [1], [0, 0, 1, 1], [], []>} : vector<2x128xf32>, vector<128x128xf32>, vector<2x128xf32> -> vector<2x128xf32>
    %c0_15 = arith.constant 0 : index
    %c0_16 = arith.constant 0 : index
    %17 = vector.load %arg7[%c0_15, %c0_16] : memref<1x128xf32, #tpu.memory_space<vmem>>, vector<1x128xf32>
    %18 = vector.broadcast %17 : vector<1x128xf32> to vector<2x128xf32>
    %19 = arith.addf %16, %18 : vector<2x128xf32>
    %20 = tpu.iota {dimensions = array<i32: 1>} : vector<2x128xi32>
    %c10_i32 = arith.constant 10 : i32
    %21 = vector.broadcast %c10_i32 : i32 to vector<2x128xi32>
    %22 = arith.cmpi slt, %20, %21 : vector<2x128xi32>
    %cst_17 = arith.constant -1.000000e+30 : f32
    %23 = vector.broadcast %cst_17 : f32 to vector<2x128xf32>
    %24 = arith.select %22, %19, %23 : vector<2x128xi1>, vector<2x128xf32>
    %cst_18 = arith.constant dense<0xFF800000> : vector<2xf32>
    %25 = vector.multi_reduction <maximumf>, %24, %cst_18 [1] : vector<2x128xf32> to vector<2xf32>
    %26 = vector.shape_cast %25 : vector<2xf32> to vector<2x1xf32>
    %27 = vector.broadcast %26 : vector<2x1xf32> to vector<2x128xf32>
    %28 = arith.subf %24, %27 : vector<2x128xf32>
    %29 = math.exp %28 : vector<2x128xf32>
    %cst_19 = arith.constant dense<0.000000e+00> : vector<2xf32>
    %30 = vector.multi_reduction <add>, %29, %cst_19 [1] : vector<2x128xf32> to vector<2xf32>
    %31 = vector.shape_cast %30 : vector<2xf32> to vector<2x1xf32>
    %32 = tpu.reciprocal %31 {approx = true} : vector<2x1xf32> -> vector<2x1xf32>
    %33 = vector.broadcast %32 : vector<2x1xf32> to vector<2x128xf32>
    %34 = arith.mulf %29, %33 : vector<2x128xf32>
    %35 = vector.extract_strided_slice %34 {offsets = [0, 0], sizes = [2, 10], strides = [1, 1]} : vector<2x128xf32> to vector<2x10xf32>
    %c0_20 = arith.constant 0 : index
    %c0_21 = arith.constant 0 : index
    %36 = vector.load %arg8[%c0_20, %c0_21] : memref<2x10xf32, #tpu.memory_space<vmem>>, vector<2x10xf32>
    tpu.vector_store %arg8[%c0_20, %c0_21], %35 {strides = array<i32>} : memref<2x10xf32, #tpu.memory_space<vmem>>, vector<2x10xf32>,
    return
  }
  func.func @transform_0(%arg0: i32) -> (i32, i32) {
    %c0_i32 = arith.constant 0 : i32
    %c0_i32_0 = arith.constant 0 : i32
    %c0_i32_1 = arith.constant 0 : i32
    return %c0_i32, %c0_i32_0 : i32, i32
  }
  func.func @transform_1(%arg0: i32) -> (i32, i32) {
    %c0_i32 = arith.constant 0 : i32
    %c0_i32_0 = arith.constant 0 : i32
    %c0_i32_1 = arith.constant 0 : i32
    return %c0_i32, %c0_i32_0 : i32, i32
  }
  func.func @transform_2(%arg0: i32) -> (i32, i32) {
    %c0_i32 = arith.constant 0 : i32
    %c0_i32_0 = arith.constant 0 : i32
    %c0_i32_1 = arith.constant 0 : i32
    return %c0_i32, %c0_i32_0 : i32, i32
  }
  func.func @transform_3(%arg0: i32) -> (i32, i32) {
    %c0_i32 = arith.constant 0 : i32
    %c0_i32_0 = arith.constant 0 : i32
    %c0_i32_1 = arith.constant 0 : i32
    return %c0_i32, %c0_i32_0 : i32, i32
  }
  func.func @transform_4(%arg0: i32) -> (i32, i32) {
    %c0_i32 = arith.constant 0 : i32
    %c0_i32_0 = arith.constant 0 : i32
    %c0_i32_1 = arith.constant 0 : i32
    return %c0_i32, %c0_i32_0 : i32, i32
  }
  func.func @transform_5(%arg0: i32) -> (i32, i32) {
    %c0_i32 = arith.constant 0 : i32
    %c0_i32_0 = arith.constant 0 : i32
    %c0_i32_1 = arith.constant 0 : i32
    return %c0_i32, %c0_i32_0 : i32, i32
  }
  func.func @transform_6(%arg0: i32) -> (i32, i32) {
    %c0_i32 = arith.constant 0 : i32
    %c0_i32_0 = arith.constant 0 : i32
    %c0_i32_1 = arith.constant 0 : i32
    return %c0_i32, %c0_i32_0 : i32, i32
  }
  func.func @transform_7(%arg0: i32) -> (i32, i32) {
    %c0_i32 = arith.constant 0 : i32
    %c0_i32_0 = arith.constant 0 : i32
    %c0_i32_1 = arith.constant 0 : i32
    return %c0_i32, %c0_i32_0 : i32, i32
  }
}

</mosaic_0001>

<llo_original>
// kernel: mlp_forward.1
$region0: #{mlp_forward.1}
  #allocation0 [shape = 'u32[]', space=smem, size = 0x4, offset = 0x4, fixed_abs, tag = 'smem constant byte address 0x4 - core index']
  #allocation1 [shape = 'u32[144,128]{1,0:T(1,128)}', space=vmem, size = 0x12000, scoped, tag = 'internal scratch']
  %s0 = inlined_call_operand.hbm [shape: f32[2,784], index: 0, kind: input, shape index: {}]
  %s1 = inlined_call_operand.hbm [shape: f32[784,256], index: 1, kind: input, shape index: {}]
  %s2 = inlined_call_operand.hbm [shape: f32[1,256], index: 2, kind: input, shape index: {}]
  %s3 = inlined_call_operand.hbm [shape: f32[256,128], index: 3, kind: input, shape index: {}]
  %s4 = inlined_call_operand.vmem [shape: f32[1,128], index: 4, kind: input, shape index: {}]
  %s5 = inlined_call_operand.hbm [shape: f32[128,128], index: 5, kind: input, shape index: {}]
  %s6 = inlined_call_operand.vmem [shape: f32[1,128], index: 6, kind: input, shape index: {}]
  %s7 = inlined_call_operand.hbm [shape: f32[2,10], index: 7, kind: output, shape index: {}]
  %s8 = sld [smem:[#allocation0]]
  $region58: #{mlp_forward.1} parent=0
    _
  %s10 = ssub.s32 1, %s8
  %s11 = scalar_select 0, %s10, %s8
  $region1: #{mlp_forward.1} parent=0
    #allocation2 [shape = 'u8[7168]{0}', space=vmem, size = 0x1c00, scoped, tag = 'input window, operand 0, single buffered']
    #allocation3 [shape = 's32[1]{0}', space=sflag, size = 0x4, scoped, tag = 'scoped memory for mlp_forward.1']
    #allocation4 [shape = 's32[1]{0}', space=sflag, size = 0x4, scoped, tag = 'scoped memory for mlp_forward.1']
    #allocation5 [shape = 'u8[802816]{0}', space=vmem, size = 0xc4000, scoped, tag = 'input window, operand 1, single buffered']
    #allocation6 [shape = 's32[1]{0}', space=sflag, size = 0x4, scoped, tag = 'scoped memory for mlp_forward.1']
    #allocation7 [shape = 'u8[1024]{0}', space=vmem, size = 0x400, scoped, tag = 'input window, operand 2, single buffered']
    #allocation8 [shape = 'u8[131072]{0}', space=vmem, size = 0x20000, scoped, tag = 'input window, operand 3, single buffered']
    #allocation9 [shape = 's32[1]{0}', space=sflag, size = 0x4, scoped, tag = 'scoped memory for mlp_forward.1']
    #allocation10 [shape = 'u8[65536]{0}', space=vmem, size = 0x10000, scoped, tag = 'input window, operand 5, single buffered']
    #allocation11 [shape = 'u8[1024]{0}', space=vmem, size = 0x400, scoped, tag = 'output window, operand 0, single buffered']
    %12 = vsyncpa [#allocation3], 0
    %13 = vsyncpa [#allocation6], 0
    %14 = vsyncpa [#allocation9], 0
    %15 = vsyncpa [#allocation4], 0
    // Predicated region
    $region2: #{mlp_forward.1} parent=1 // pred_check
      _
    $region3: #{mlp_forward.1} parent=1 // pred_check_branch
      %17 = sbr.rel (0) target = $region5
    $region4: #{mlp_forward.1} parent=1 // pred_region
      %s19 = ssub.s32 224, 224
      %20 = vsyncadd [#allocation3], %s19
      %s22 = sshll.u32 [#allocation2], 4
      %s23 = int_to_ptr.vmem [resolvable:$true] %s22
      %25 = dma.hbm_to_vmem [thread:$0]  %s0, 224, %s23, [#allocation3]
    $region5: #{mlp_forward.1} parent=1 // pred_fallthru
      _
    // Predicated region
    $region6: #{mlp_forward.1} parent=1 // pred_check
      _
    $region7: #{mlp_forward.1} parent=1 // pred_check_branch
      %27 = sbr.rel (0) target = $region9
    $region8: #{mlp_forward.1} parent=1 // pred_region
      %s29 = ssub.s32 25088, 25088
      %30 = vsyncadd [#allocation6], %s29
      %s31 = sshll.u32 [#allocation5], 4
      %s32 = int_to_ptr.vmem [resolvable:$true] %s31
      %37 = dma.hbm_to_vmem [thread:$0]  %s1, 25088, %s32, [#allocation6], 256, 256, 16
    $region9: #{mlp_forward.1} parent=1 // pred_fallthru
      _
    // Predicated region
    $region10: #{mlp_forward.1} parent=1 // pred_check
      _
    $region11: #{mlp_forward.1} parent=1 // pred_check_branch
      %39 = sbr.rel (0) target = $region13
    $region12: #{mlp_forward.1} parent=1 // pred_region
      %s41 = ssub.s32 32, 32
      %42 = vsyncadd [#allocation6], %s41
      %s44 = sshll.u32 [#allocation7], 4
      %s45 = int_to_ptr.vmem [resolvable:$true] %s44
      %47 = dma.hbm_to_vmem [thread:$0]  %s2, 32, %s45, [#allocation6]
    $region13: #{mlp_forward.1} parent=1 // pred_fallthru
      _
    // Predicated region
    $region14: #{mlp_forward.1} parent=1 // pred_check
      _
    $region15: #{mlp_forward.1} parent=1 // pred_check_branch
      %49 = sbr.rel (0) target = $region17
    $region16: #{mlp_forward.1} parent=1 // pred_region
      %s51 = ssub.s32 4096, 4096
      %52 = vsyncadd [#allocation9], %s51
      %s53 = sshll.u32 [#allocation8], 4
      %s54 = int_to_ptr.vmem [resolvable:$true] %s53
      %59 = dma.hbm_to_vmem [thread:$0]  %s3, 4096, %s54, [#allocation9], 128, 128, 8
    $region17: #{mlp_forward.1} parent=1 // pred_fallthru
      _
    // Predicated region
    $region18: #{mlp_forward.1} parent=1 // pred_check
      _
    $region19: #{mlp_forward.1} parent=1 // pred_check_branch
      %61 = sbr.rel (0) target = $region21
    $region20: #{mlp_forward.1} parent=1 // pred_region
      _
    $region21: #{mlp_forward.1} parent=1 // pred_fallthru
      _
    // Predicated region
    $region22: #{mlp_forward.1} parent=1 // pred_check
      _
    $region23: #{mlp_forward.1} parent=1 // pred_check_branch
      %63 = sbr.rel (0) target = $region25
    $region24: #{mlp_forward.1} parent=1 // pred_region
      %s65 = ssub.s32 2048, 2048
      %66 = vsyncadd [#allocation9], %s65
      %s67 = sshll.u32 [#allocation10], 4
      %s68 = int_to_ptr.vmem [resolvable:$true] %s67
      %73 = dma.hbm_to_vmem [thread:$0]  %s5, 2048, %s68, [#allocation9], 128, 128, 8
    $region25: #{mlp_forward.1} parent=1 // pred_fallthru
      _
    // Predicated region
    $region26: #{mlp_forward.1} parent=1 // pred_check
      _
    $region27: #{mlp_forward.1} parent=1 // pred_check_branch
      %75 = sbr.rel (0) target = $region29
    $region28: #{mlp_forward.1} parent=1 // pred_region
      _
    $region29: #{mlp_forward.1} parent=1 // pred_fallthru
      _
    // Predicated region
    $region30: #{mlp_forward.1} parent=1 // pred_check
      _
    $region31: #{mlp_forward.1} parent=1 // pred_check_branch
      %77 = sbr.rel (0) target = $region33
    $region32: #{mlp_forward.1} parent=1 // pred_region
      %78 = dma.done [#allocation3], 224
    $region33: #{mlp_forward.1} parent=1 // pred_fallthru
      _
    // Predicated region
    $region34: #{mlp_forward.1} parent=1 // pred_check
      _
    $region35: #{mlp_forward.1} parent=1 // pred_check_branch
      %80 = sbr.rel (0) target = $region37
    $region36: #{mlp_forward.1} parent=1 // pred_region
      %81 = dma.done [#allocation6], 25088
    $region37: #{mlp_forward.1} parent=1 // pred_fallthru
      _
    // Predicated region
    $region38: #{mlp_forward.1} parent=1 // pred_check
      _
    $region39: #{mlp_forward.1} parent=1 // pred_check_branch
      %83 = sbr.rel (0) target = $region41
    $region40: #{mlp_forward.1} parent=1 // pred_region
      %84 = dma.done [#allocation6], 32
    $region41: #{mlp_forward.1} parent=1 // pred_fallthru
      _
    // Predicated region
    $region42: #{mlp_forward.1} parent=1 // pred_check
      _
    $region43: #{mlp_forward.1} parent=1 // pred_check_branch
      %86 = sbr.rel (0) target = $region45
    $region44: #{mlp_forward.1} parent=1 // pred_region
      %87 = dma.done [#allocation9], 4096
    $region45: #{mlp_forward.1} parent=1 // pred_fallthru
      _
    // Predicated region
    $region46: #{mlp_forward.1} parent=1 // pred_check
      _
    $region47: #{mlp_forward.1} parent=1 // pred_check_branch
      %89 = sbr.rel (0) target = $region49
    $region48: #{mlp_forward.1} parent=1 // pred_region
      %90 = dma.done [#allocation9], 2048
    $region49: #{mlp_forward.1} parent=1 // pred_fallthru
      _
    %v91 = vld [vmem:[#allocation2] sm:$0xff]
    %v92 = vld [vmem:[#allocation2 + $0x8] sm:$0x3f]
    %v93 = vld [vmem:[#allocation5] sm:$0xff]
    %v94 = vld [vmem:[#allocation5 + $0x8] sm:$0xff]
    %v95 = vld [vmem:[#allocation5 + $0x10] sm:$0xff]
    %v96 = vld [vmem:[#allocation5 + $0x18] sm:$0xff]
    %v97 = vld [vmem:[#allocation5 + $0x20] sm:$0xff]
    %v98 = vld [vmem:[#allocation5 + $0x28] sm:$0xff]
    %v99 = vld [vmem:[#allocation5 + $0x30] sm:$0xff]
    %v100 = vld [vmem:[#allocation5 + $0x38] sm:$0xff]
    %v101 = vld [vmem:[#allocation5 + $0x40] sm:$0xff]
    %v102 = vld [vmem:[#allocation5 + $0x48] sm:$0xff]
    %v103 = vld [vmem:[#allocation5 + $0x50] sm:$0xff]
    %v104 = vld [vmem:[#allocation5 + $0x58] sm:$0xff]
    %v105 = vld [vmem:[#allocation5 + $0x60] sm:$0xff]
    %v106 = vld [vmem:[#allocation5 + $0x68] sm:$0xff]
    %v107 = vld [vmem:[#allocation5 + $0x70] sm:$0xff]
    %v108 = vld [vmem:[#allocation5 + $0x78] sm:$0xff]
    %v109 = vld [vmem:[#allocation5 + $0x80] sm:$0xff]
    %v110 = vld [vmem:[#allocation5 + $0x88] sm:$0xff]
    %v111 = vld [vmem:[#allocation5 + $0x90] sm:$0xff]
    %v112 = vld [vmem:[#allocation5 + $0x98] sm:$0xff]
    %v113 = vld [vmem:[#allocation5 + $0xa0] sm:$0xff]
    %v114 = vld [vmem:[#allocation5 + $0xa8] sm:$0xff]
    %v115 = vld [vmem:[#allocation5 + $0xb0] sm:$0xff]
    %v116 = vld [vmem:[#allocation5 + $0xb8] sm:$0xff]
    %v117 = vld [vmem:[#allocation5 + $0xc0] sm:$0xff]
    %v118 = vld [vmem:[#allocation5 + $0xc8] sm:$0xff]
    %v119 = vld [vmem:[#allocation5 + $0xd0] sm:$0xff]
    %v120 = vld [vmem:[#allocation5 + $0xd8] sm:$0xff]
    %v121 = vld [vmem:[#allocation5 + $0xe0] sm:$0xff]
    %v122 = vld [vmem:[#allocation5 + $0xe8] sm:$0xff]
    %v123 = vld [vmem:[#allocation5 + $0xf0] sm:$0xff]
    %v124 = vld [vmem:[#allocation5 + $0xf8] sm:$0xff]
    %v125 = vld [vmem:[#allocation5 + $0x100] sm:$0xff]
    %v126 = vld [vmem:[#allocation5 + $0x108] sm:$0xff]
    %v127 = vld [vmem:[#allocation5 + $0x110] sm:$0xff]
    %v128 = vld [vmem:[#allocation5 + $0x118] sm:$0xff]
    %v129 = vld [vmem:[#allocation5 + $0x120] sm:$0xff]
    %v130 = vld [vmem:[#allocation5 + $0x128] sm:$0xff]
    %v131 = vld [vmem:[#allocation5 + $0x130] sm:$0xff]
    %v132 = vld [vmem:[#allocation5 + $0x138] sm:$0xff]
    %v133 = vld [vmem:[#allocation5 + $0x140] sm:$0xff]
    %v134 = vld [vmem:[#allocation5 + $0x148] sm:$0xff]
    %v135 = vld [vmem:[#allocation5 + $0x150] sm:$0xff]
    %v136 = vld [vmem:[#allocation5 + $0x158] sm:$0xff]
    %v137 = vld [vmem:[#allocation5 + $0x160] sm:$0xff]
    %v138 = vld [vmem:[#allocation5 + $0x168] sm:$0xff]
    %v139 = vld [vmem:[#allocation5 + $0x170] sm:$0xff]
    %v140 = vld [vmem:[#allocation5 + $0x178] sm:$0xff]
    %v141 = vld [vmem:[#allocation5 + $0x180] sm:$0xff]
    %v142 = vld [vmem:[#allocation5 + $0x188] sm:$0xff]
    %v143 = vld [vmem:[#allocation5 + $0x190] sm:$0xff]
    %v144 = vld [vmem:[#allocation5 + $0x198] sm:$0xff]
    %v145 = vld [vmem:[#allocation5 + $0x1a0] sm:$0xff]
    %v146 = vld [vmem:[#allocation5 + $0x1a8] sm:$0xff]
    %v147 = vld [vmem:[#allocation5 + $0x1b0] sm:$0xff]
    %v148 = vld [vmem:[#allocation5 + $0x1b8] sm:$0xff]
    %v149 = vld [vmem:[#allocation5 + $0x1c0] sm:$0xff]
    %v150 = vld [vmem:[#allocation5 + $0x1c8] sm:$0xff]
    %v151 = vld [vmem:[#allocation5 + $0x1d0] sm:$0xff]
    %v152 = vld [vmem:[#allocation5 + $0x1d8] sm:$0xff]
    %v153 = vld [vmem:[#allocation5 + $0x1e0] sm:$0xff]
    %v154 = vld [vmem:[#allocation5 + $0x1e8] sm:$0xff]
    %v155 = vld [vmem:[#allocation5 + $0x1f0] sm:$0xff]
    %v156 = vld [vmem:[#allocation5 + $0x1f8] sm:$0xff]
    %v157 = vld [vmem:[#allocation5 + $0x200] sm:$0xff]
    %v158 = vld [vmem:[#allocation5 + $0x208] sm:$0xff]
    %v159 = vld [vmem:[#allocation5 + $0x210] sm:$0xff]
    %v160 = vld [vmem:[#allocation5 + $0x218] sm:$0xff]
    %v161 = vld [vmem:[#allocation5 + $0x220] sm:$0xff]
    %v162 = vld [vmem:[#allocation5 + $0x228] sm:$0xff]
    %v163 = vld [vmem:[#allocation5 + $0x230] sm:$0xff]
    %v164 = vld [vmem:[#allocation5 + $0x238] sm:$0xff]
    %v165 = vld [vmem:[#allocation5 + $0x240] sm:$0xff]
    %v166 = vld [vmem:[#allocation5 + $0x248] sm:$0xff]
    %v167 = vld [vmem:[#allocation5 + $0x250] sm:$0xff]
    %v168 = vld [vmem:[#allocation5 + $0x258] sm:$0xff]
    %v169 = vld [vmem:[#allocation5 + $0x260] sm:$0xff]
    %v170 = vld [vmem:[#allocation5 + $0x268] sm:$0xff]
    %v171 = vld [vmem:[#allocation5 + $0x270] sm:$0xff]
    %v172 = vld [vmem:[#allocation5 + $0x278] sm:$0xff]
    %v173 = vld [vmem:[#allocation5 + $0x280] sm:$0xff]
    %v174 = vld [vmem:[#allocation5 + $0x288] sm:$0xff]
    %v175 = vld [vmem:[#allocation5 + $0x290] sm:$0xff]
    %v176 = vld [vmem:[#allocation5 + $0x298] sm:$0xff]
    %v177 = vld [vmem:[#allocation5 + $0x2a0] sm:$0xff]
    %v178 = vld [vmem:[#allocation5 + $0x2a8] sm:$0xff]
    %v179 = vld [vmem:[#allocation5 + $0x2b0] sm:$0xff]
    %v180 = vld [vmem:[#allocation5 + $0x2b8] sm:$0xff]
    %v181 = vld [vmem:[#allocation5 + $0x2c0] sm:$0xff]
    %v182 = vld [vmem:[#allocation5 + $0x2c8] sm:$0xff]
    %v183 = vld [vmem:[#allocation5 + $0x2d0] sm:$0xff]
    %v184 = vld [vmem:[#allocation5 + $0x2d8] sm:$0xff]
    %v185 = vld [vmem:[#allocation5 + $0x2e0] sm:$0xff]
    %v186 = vld [vmem:[#allocation5 + $0x2e8] sm:$0xff]
    %v187 = vld [vmem:[#allocation5 + $0x2f0] sm:$0xff]
    %v188 = vld [vmem:[#allocation5 + $0x2f8] sm:$0xff]
    %v189 = vld [vmem:[#allocation5 + $0x300] sm:$0xff]
    %v190 = vld [vmem:[#allocation5 + $0x308] sm:$0xff]
    %v191 = vld [vmem:[#allocation5 + $0x310] sm:$0xff]
    %v192 = vld [vmem:[#allocation5 + $0x318] sm:$0xff]
    %v193 = vld [vmem:[#allocation5 + $0x320] sm:$0xff]
    %v194 = vld [vmem:[#allocation5 + $0x328] sm:$0xff]
    %v195 = vld [vmem:[#allocation5 + $0x330] sm:$0xff]
    %v196 = vld [vmem:[#allocation5 + $0x338] sm:$0xff]
    %v197 = vld [vmem:[#allocation5 + $0x340] sm:$0xff]
    %v198 = vld [vmem:[#allocation5 + $0x348] sm:$0xff]
    %v199 = vld [vmem:[#allocation5 + $0x350] sm:$0xff]
    %v200 = vld [vmem:[#allocation5 + $0x358] sm:$0xff]
    %v201 = vld [vmem:[#allocation5 + $0x360] sm:$0xff]
    %v202 = vld [vmem:[#allocation5 + $0x368] sm:$0xff]
    %v203 = vld [vmem:[#allocation5 + $0x370] sm:$0xff]
    %v204 = vld [vmem:[#allocation5 + $0x378] sm:$0xff]
    %v205 = vld [vmem:[#allocation5 + $0x380] sm:$0xff]
    %v206 = vld [vmem:[#allocation5 + $0x388] sm:$0xff]
    %v207 = vld [vmem:[#allocation5 + $0x390] sm:$0xff]
    %v208 = vld [vmem:[#allocation5 + $0x398] sm:$0xff]
    %v209 = vld [vmem:[#allocation5 + $0x3a0] sm:$0xff]
    %v210 = vld [vmem:[#allocation5 + $0x3a8] sm:$0xff]
    %v211 = vld [vmem:[#allocation5 + $0x3b0] sm:$0xff]
    %v212 = vld [vmem:[#allocation5 + $0x3b8] sm:$0xff]
    %v213 = vld [vmem:[#allocation5 + $0x3c0] sm:$0xff]
    %v214 = vld [vmem:[#allocation5 + $0x3c8] sm:$0xff]
    %v215 = vld [vmem:[#allocation5 + $0x3d0] sm:$0xff]
    %v216 = vld [vmem:[#allocation5 + $0x3d8] sm:$0xff]
    %v217 = vld [vmem:[#allocation5 + $0x3e0] sm:$0xff]
    %v218 = vld [vmem:[#allocation5 + $0x3e8] sm:$0xff]
    %v219 = vld [vmem:[#allocation5 + $0x3f0] sm:$0xff]
    %v220 = vld [vmem:[#allocation5 + $0x3f8] sm:$0xff]
    %v221 = vld [vmem:[#allocation5 + $0x400] sm:$0xff]
    %v222 = vld [vmem:[#allocation5 + $0x408] sm:$0xff]
    %v223 = vld [vmem:[#allocation5 + $0x410] sm:$0xff]
    %v224 = vld [vmem:[#allocation5 + $0x418] sm:$0xff]
    %v225 = vld [vmem:[#allocation5 + $0x420] sm:$0xff]
    %v226 = vld [vmem:[#allocation5 + $0x428] sm:$0xff]
    %v227 = vld [vmem:[#allocation5 + $0x430] sm:$0xff]
    %v228 = vld [vmem:[#allocation5 + $0x438] sm:$0xff]
    %v229 = vld [vmem:[#allocation5 + $0x440] sm:$0xff]
    %v230 = vld [vmem:[#allocation5 + $0x448] sm:$0xff]
    %v231 = vld [vmem:[#allocation5 + $0x450] sm:$0xff]
    %v232 = vld [vmem:[#allocation5 + $0x458] sm:$0xff]
    %v233 = vld [vmem:[#allocation5 + $0x460] sm:$0xff]
    %v234 = vld [vmem:[#allocation5 + $0x468] sm:$0xff]
    %v235 = vld [vmem:[#allocation5 + $0x470] sm:$0xff]
    %v236 = vld [vmem:[#allocation5 + $0x478] sm:$0xff]
    %v237 = vld [vmem:[#allocation5 + $0x480] sm:$0xff]
    %v238 = vld [vmem:[#allocation5 + $0x488] sm:$0xff]
    %v239 = vld [vmem:[#allocation5 + $0x490] sm:$0xff]
    %v240 = vld [vmem:[#allocation5 + $0x498] sm:$0xff]
    %v241 = vld [vmem:[#allocation5 + $0x4a0] sm:$0xff]
    %v242 = vld [vmem:[#allocation5 + $0x4a8] sm:$0xff]
    %v243 = vld [vmem:[#allocation5 + $0x4b0] sm:$0xff]
    %v244 = vld [vmem:[#allocation5 + $0x4b8] sm:$0xff]
    %v245 = vld [vmem:[#allocation5 + $0x4c0] sm:$0xff]
    %v246 = vld [vmem:[#allocation5 + $0x4c8] sm:$0xff]
    %v247 = vld [vmem:[#allocation5 + $0x4d0] sm:$0xff]
    %v248 = vld [vmem:[#allocation5 + $0x4d8] sm:$0xff]
    %v249 = vld [vmem:[#allocation5 + $0x4e0] sm:$0xff]
    %v250 = vld [vmem:[#allocation5 + $0x4e8] sm:$0xff]
    %v251 = vld [vmem:[#allocation5 + $0x4f0] sm:$0xff]
    %v252 = vld [vmem:[#allocation5 + $0x4f8] sm:$0xff]
    %v253 = vld [vmem:[#allocation5 + $0x500] sm:$0xff]
    %v254 = vld [vmem:[#allocation5 + $0x508] sm:$0xff]
    %v255 = vld [vmem:[#allocation5 + $0x510] sm:$0xff]
    %v256 = vld [vmem:[#allocation5 + $0x518] sm:$0xff]
    %v257 = vld [vmem:[#allocation5 + $0x520] sm:$0xff]
    %v258 = vld [vmem:[#allocation5 + $0x528] sm:$0xff]
    %v259 = vld [vmem:[#allocation5 + $0x530] sm:$0xff]
    %v260 = vld [vmem:[#allocation5 + $0x538] sm:$0xff]
    %v261 = vld [vmem:[#allocation5 + $0x540] sm:$0xff]
    %v262 = vld [vmem:[#allocation5 + $0x548] sm:$0xff]
    %v263 = vld [vmem:[#allocation5 + $0x550] sm:$0xff]
    %v264 = vld [vmem:[#allocation5 + $0x558] sm:$0xff]
    %v265 = vld [vmem:[#allocation5 + $0x560] sm:$0xff]
    %v266 = vld [vmem:[#allocation5 + $0x568] sm:$0xff]
    %v267 = vld [vmem:[#allocation5 + $0x570] sm:$0xff]
    %v268 = vld [vmem:[#allocation5 + $0x578] sm:$0xff]
    %v269 = vld [vmem:[#allocation5 + $0x580] sm:$0xff]
    %v270 = vld [vmem:[#allocation5 + $0x588] sm:$0xff]
    %v271 = vld [vmem:[#allocation5 + $0x590] sm:$0xff]
    %v272 = vld [vmem:[#allocation5 + $0x598] sm:$0xff]
    %v273 = vld [vmem:[#allocation5 + $0x5a0] sm:$0xff]
    %v274 = vld [vmem:[#allocation5 + $0x5a8] sm:$0xff]
    %v275 = vld [vmem:[#allocation5 + $0x5b0] sm:$0xff]
    %v276 = vld [vmem:[#allocation5 + $0x5b8] sm:$0xff]
    %v277 = vld [vmem:[#allocation5 + $0x5c0] sm:$0xff]
    %v278 = vld [vmem:[#allocation5 + $0x5c8] sm:$0xff]
    %v279 = vld [vmem:[#allocation5 + $0x5d0] sm:$0xff]
    %v280 = vld [vmem:[#allocation5 + $0x5d8] sm:$0xff]
    %v281 = vld [vmem:[#allocation5 + $0x5e0] sm:$0xff]
    %v282 = vld [vmem:[#allocation5 + $0x5e8] sm:$0xff]
    %v283 = vld [vmem:[#allocation5 + $0x5f0] sm:$0xff]
    %v284 = vld [vmem:[#allocation5 + $0x5f8] sm:$0xff]
    %v285 = vld [vmem:[#allocation5 + $0x600] sm:$0xff]
    %v286 = vld [vmem:[#allocation5 + $0x608] sm:$0xff]
    %v287 = vld [vmem:[#allocation5 + $0x610] sm:$0xff]
    %v288 = vld [vmem:[#allocation5 + $0x618] sm:$0xff]
    %v289 = vld [vmem:[#allocation7] sm:$0x3]
    %v291 = vlaneseq
    %v292 = vshrl.u32 %v291, 7
    %v293 = vsub.s32 0, %v292
    %v294 = vrot.slane %v289, %v293
    %v295 = vlaneseq
    %v296 = vshrl.u32 %v295, 7
    %v297 = vsub.s32 1, %v296
    %v298 = vrot.slane %v289, %v297
    %v303 = vcombine.high %v91, %v91
    %v305 = vunpack.c.l.s4 1983009808
    %v306 = vunpack.c.0.s8 %v305
    %v307 = vlaneseq
    %v308 = vshrl.u32 %v307, 7
    %v309 = vsub.s32 %v306, %v308
    %v310 = vrot.slane %v91, %v309
    %v312 = vunpack.c.l.s4 1983009808
    %v313 = vunpack.c.0.s8 %v312
    %v314 = vlaneseq
    %v315 = vshrl.u32 %v314, 7
    %v316 = vsub.s32 %v313, %v315
    %v317 = vrot.slane %v303, %v316
    %v318 = vcombine.high %v310, %v310
    %v319 = vcombine.high %v317, %v317
    %v320 = vcombine.high %v92, %v92
    %v322 = vunpack.c.l.s4 1983009808
    %v323 = vunpack.c.0.s8 %v322
    %v324 = vlaneseq
    %v325 = vshrl.u32 %v324, 7
    %v326 = vsub.s32 %v323, %v325
    %v327 = vrot.slane %v92, %v326
    %v329 = vunpack.c.l.s4 1983009808
    %v330 = vunpack.c.0.s8 %v329
    %v331 = vlaneseq
    %v332 = vshrl.u32 %v331, 7
    %v333 = vsub.s32 %v330, %v332
    %v334 = vrot.slane %v320, %v333
    %v335 = vcombine.high %v327, %v327
    %vm342 = vcmask 130048
    %v343 = vsel %vm342, %v334, 0
    %345 = vmatprep.subr.mxu0 %v124
    %346 = vmatpush1.msra.mxu0 %v123
    %347 = vmatprep.subr.mxu0 %v122
    %348 = vmatpush1.msra.mxu0 %v121
    %349 = vmatprep.subr.mxu0 %v120
    %350 = vmatpush1.msra.mxu0 %v119
    %351 = vmatprep.subr.mxu0 %v118
    %352 = vmatpush1.msra.mxu0 %v117
    %353 = vmatprep.subr.mxu0 %v116
    %354 = vmatpush1.msra.mxu0 %v115
    %355 = vmatprep.subr.mxu0 %v114
    %356 = vmatpush1.msra.mxu0 %v113
    %357 = vmatprep.subr.mxu0 %v112
    %358 = vmatpush1.msra.mxu0 %v111
    %359 = vmatprep.subr.mxu0 %v110
    %360 = vmatpush1.msra.mxu0 %v109
    %361 = vmatprep.subr.mxu0 %v108
    %362 = vmatpush1.msra.mxu0 %v107
    %363 = vmatprep.subr.mxu0 %v106
    %364 = vmatpush1.msra.mxu0 %v105
    %365 = vmatprep.subr.mxu0 %v104
    %366 = vmatpush1.msra.mxu0 %v103
    %367 = vmatprep.subr.mxu0 %v102
    %368 = vmatpush1.msra.mxu0 %v101
    %369 = vmatprep.subr.mxu0 %v100
    %370 = vmatpush1.msra.mxu0 %v99
    %371 = vmatprep.subr.mxu0 %v98
    %372 = vmatpush1.msra.mxu0 %v97
    %373 = vmatprep.subr.mxu0 %v96
    %374 = vmatpush1.msra.mxu0 %v95
    %375 = vmatprep.subr.mxu0 %v94
    %376 = vmatpush1.msra.mxu0 %v93
    %377 = vmatprep.subr.mxu0 %v156
    %378 = vmatpush2.msra.mxu0 %v155
    %379 = vmatprep.subr.mxu0 %v154
    %380 = vmatpush2.msra.mxu0 %v153
    %381 = vmatprep.subr.mxu0 %v152
    %382 = vmatpush2.msra.mxu0 %v151
    %383 = vmatprep.subr.mxu0 %v150
    %384 = vmatpush2.msra.mxu0 %v149
    %385 = vmatprep.subr.mxu0 %v148
    %386 = vmatpush2.msra.mxu0 %v147
    %387 = vmatprep.subr.mxu0 %v146
    %388 = vmatpush2.msra.mxu0 %v145
    %389 = vmatprep.subr.mxu0 %v144
    %390 = vmatpush2.msra.mxu0 %v143
    %391 = vmatprep.subr.mxu0 %v142
    %392 = vmatpush2.msra.mxu0 %v141
    %393 = vmatprep.subr.mxu0 %v140
    %394 = vmatpush2.msra.mxu0 %v139
    %395 = vmatprep.subr.mxu0 %v138
    %396 = vmatpush2.msra.mxu0 %v137
    %397 = vmatprep.subr.mxu0 %v136
    %398 = vmatpush2.msra.mxu0 %v135
    %399 = vmatprep.subr.mxu0 %v134
    %400 = vmatpush2.msra.mxu0 %v133
    %401 = vmatprep.subr.mxu0 %v132
    %402 = vmatpush2.msra.mxu0 %v131
    %403 = vmatprep.subr.mxu0 %v130
    %404 = vmatpush2.msra.mxu0 %v129
    %405 = vmatprep.subr.mxu0 %v128
    %406 = vmatpush2.msra.mxu0 %v127
    %407 = vmatprep.subr.mxu0 %v126
    %408 = vmatpush2.msra.mxu0 %v125
    %409 = vmatprep.mubr.f32.mxu0 %v318
    %410 = vmatmul.mubr.f32.gmra.mxu0 %v310
    %v411 = vpop.f32.mrf.mxu0
    %v412 = vadd.f32 %v294, %v411
    %v413 = vpop.f32.mrf.mxu0
    %v414 = vadd.f32 %v298, %v413
    %415 = vdwg.mxu0
    %416 = vmatprep.subr.mxu0 %v188
    %417 = vmatpush1.msra.mxu0 %v187
    %418 = vmatprep.subr.mxu0 %v186
    %419 = vmatpush1.msra.mxu0 %v185
    %420 = vmatprep.subr.mxu0 %v184
    %421 = vmatpush1.msra.mxu0 %v183
    %422 = vmatprep.subr.mxu0 %v182
    %423 = vmatpush1.msra.mxu0 %v181
    %424 = vmatprep.subr.mxu0 %v180
    %425 = vmatpush1.msra.mxu0 %v179
    %426 = vmatprep.subr.mxu0 %v178
    %427 = vmatpush1.msra.mxu0 %v177
    %428 = vmatprep.subr.mxu0 %v176
    %429 = vmatpush1.msra.mxu0 %v175
    %430 = vmatprep.subr.mxu0 %v174
    %431 = vmatpush1.msra.mxu0 %v173
    %432 = vmatprep.subr.mxu0 %v172
    %433 = vmatpush1.msra.mxu0 %v171
    %434 = vmatprep.subr.mxu0 %v170
    %435 = vmatpush1.msra.mxu0 %v169
    %436 = vmatprep.subr.mxu0 %v168
    %437 = vmatpush1.msra.mxu0 %v167
    %438 = vmatprep.subr.mxu0 %v166
    %439 = vmatpush1.msra.mxu0 %v165
    %440 = vmatprep.subr.mxu0 %v164
    %441 = vmatpush1.msra.mxu0 %v163
    %442 = vmatprep.subr.mxu0 %v162
    %443 = vmatpush1.msra.mxu0 %v161
    %444 = vmatprep.subr.mxu0 %v160
    %445 = vmatpush1.msra.mxu0 %v159
    %446 = vmatprep.subr.mxu0 %v158
    %447 = vmatpush1.msra.mxu0 %v157
    %448 = vmatprep.subr.mxu0 %v220
    %449 = vmatpush2.msra.mxu0 %v219
    %450 = vmatprep.subr.mxu0 %v218
    %451 = vmatpush2.msra.mxu0 %v217
    %452 = vmatprep.subr.mxu0 %v216
    %453 = vmatpush2.msra.mxu0 %v215
    %454 = vmatprep.subr.mxu0 %v214
    %455 = vmatpush2.msra.mxu0 %v213
    %456 = vmatprep.subr.mxu0 %v212
    %457 = vmatpush2.msra.mxu0 %v211
    %458 = vmatprep.subr.mxu0 %v210
    %459 = vmatpush2.msra.mxu0 %v209
    %460 = vmatprep.subr.mxu0 %v208
    %461 = vmatpush2.msra.mxu0 %v207
    %462 = vmatprep.subr.mxu0 %v206
    %463 = vmatpush2.msra.mxu0 %v205
    %464 = vmatprep.subr.mxu0 %v204
    %465 = vmatpush2.msra.mxu0 %v203
    %466 = vmatprep.subr.mxu0 %v202
    %467 = vmatpush2.msra.mxu0 %v201
    %468 = vmatprep.subr.mxu0 %v200
    %469 = vmatpush2.msra.mxu0 %v199
    %470 = vmatprep.subr.mxu0 %v198
    %471 = vmatpush2.msra.mxu0 %v197
    %472 = vmatprep.subr.mxu0 %v196
    %473 = vmatpush2.msra.mxu0 %v195
    %474 = vmatprep.subr.mxu0 %v194
    %475 = vmatpush2.msra.mxu0 %v193
    %476 = vmatprep.subr.mxu0 %v192
    %477 = vmatpush2.msra.mxu0 %v191
    %478 = vmatprep.subr.mxu0 %v190
    %479 = vmatpush2.msra.mxu0 %v189
    %480 = vmatprep.mubr.f32.mxu0 %v319
    %481 = vmatmul.mubr.f32.gmra.mxu0 %v317
    %v482 = vpop.f32.mrf.mxu0
    %v483 = vadd.f32 %v412, %v482
    %v484 = vpop.f32.mrf.mxu0
    %v485 = vadd.f32 %v414, %v484
    %486 = vdwg.mxu0
    %487 = vmatprep.subr.mxu0 %v252
    %488 = vmatpush1.msra.mxu0 %v251
    %489 = vmatprep.subr.mxu0 %v250
    %490 = vmatpush1.msra.mxu0 %v249
    %491 = vmatprep.subr.mxu0 %v248
    %492 = vmatpush1.msra.mxu0 %v247
    %493 = vmatprep.subr.mxu0 %v246
    %494 = vmatpush1.msra.mxu0 %v245
    %495 = vmatprep.subr.mxu0 %v244
    %496 = vmatpush1.msra.mxu0 %v243
    %497 = vmatprep.subr.mxu0 %v242
    %498 = vmatpush1.msra.mxu0 %v241
    %499 = vmatprep.subr.mxu0 %v240
    %500 = vmatpush1.msra.mxu0 %v239
    %501 = vmatprep.subr.mxu0 %v238
    %502 = vmatpush1.msra.mxu0 %v237
    %503 = vmatprep.subr.mxu0 %v236
    %504 = vmatpush1.msra.mxu0 %v235
    %505 = vmatprep.subr.mxu0 %v234
    %506 = vmatpush1.msra.mxu0 %v233
    %507 = vmatprep.subr.mxu0 %v232
    %508 = vmatpush1.msra.mxu0 %v231
    %509 = vmatprep.subr.mxu0 %v230
    %510 = vmatpush1.msra.mxu0 %v229
    %511 = vmatprep.subr.mxu0 %v228
    %512 = vmatpush1.msra.mxu0 %v227
    %513 = vmatprep.subr.mxu0 %v226
    %514 = vmatpush1.msra.mxu0 %v225
    %515 = vmatprep.subr.mxu0 %v224
    %516 = vmatpush1.msra.mxu0 %v223
    %517 = vmatprep.subr.mxu0 %v222
    %518 = vmatpush1.msra.mxu0 %v221
    %519 = vmatprep.subr.mxu0 %v284
    %520 = vmatpush2.msra.mxu0 %v283
    %521 = vmatprep.subr.mxu0 %v282
    %522 = vmatpush2.msra.mxu0 %v281
    %523 = vmatprep.subr.mxu0 %v280
    %524 = vmatpush2.msra.mxu0 %v279
    %525 = vmatprep.subr.mxu0 %v278
    %526 = vmatpush2.msra.mxu0 %v277
    %527 = vmatprep.subr.mxu0 %v276
    %528 = vmatpush2.msra.mxu0 %v275
    %529 = vmatprep.subr.mxu0 %v274
    %530 = vmatpush2.msra.mxu0 %v273
    %531 = vmatprep.subr.mxu0 %v272
    %532 = vmatpush2.msra.mxu0 %v271
    %533 = vmatprep.subr.mxu0 %v270
    %534 = vmatpush2.msra.mxu0 %v269
    %535 = vmatprep.subr.mxu0 %v268
    %536 = vmatpush2.msra.mxu0 %v267
    %537 = vmatprep.subr.mxu0 %v266
    %538 = vmatpush2.msra.mxu0 %v265
    %539 = vmatprep.subr.mxu0 %v264
    %540 = vmatpush2.msra.mxu0 %v263
    %541 = vmatprep.subr.mxu0 %v262
    %542 = vmatpush2.msra.mxu0 %v261
    %543 = vmatprep.subr.mxu0 %v260
    %544 = vmatpush2.msra.mxu0 %v259
    %545 = vmatprep.subr.mxu0 %v258
    %546 = vmatpush2.msra.mxu0 %v257
    %547 = vmatprep.subr.mxu0 %v256
    %548 = vmatpush2.msra.mxu0 %v255
    %549 = vmatprep.subr.mxu0 %v254
    %550 = vmatpush2.msra.mxu0 %v253
    %551 = vmatprep.mubr.f32.mxu0 %v335
    %552 = vmatmul.mubr.f32.gmra.mxu0 %v327
    %v553 = vpop.f32.mrf.mxu0
    %v554 = vadd.f32 %v483, %v553
    %v555 = vpop.f32.mrf.mxu0
    %v556 = vadd.f32 %v485, %v555
    %557 = vdwg.mxu0
    %558 = vmatprep.subr.mxu0 0.0
    %559 = vmatpush1.msra.mxu0 0.0
    %560 = vmatprep.subr.mxu0 0.0
    %561 = vmatpush1.msra.mxu0 0.0
    %562 = vmatprep.subr.mxu0 0.0
    %563 = vmatpush1.msra.mxu0 0.0
    %564 = vmatprep.subr.mxu0 0.0
    %565 = vmatpush1.msra.mxu0 0.0
    %566 = vmatprep.subr.mxu0 0.0
    %567 = vmatpush1.msra.mxu0 0.0
    %568 = vmatprep.subr.mxu0 0.0
    %569 = vmatpush1.msra.mxu0 0.0
    %570 = vmatprep.subr.mxu0 0.0
    %571 = vmatpush1.msra.mxu0 0.0
    %572 = vmatprep.subr.mxu0 0.0
    %573 = vmatpush1.msra.mxu0 0.0
    %574 = vmatprep.subr.mxu0 0.0
    %575 = vmatpush1.msra.mxu0 0.0
    %576 = vmatprep.subr.mxu0 0.0
    %577 = vmatpush1.msra.mxu0 0.0
    %578 = vmatprep.subr.mxu0 0.0
    %579 = vmatpush1.msra.mxu0 0.0
    %580 = vmatprep.subr.mxu0 0.0
    %581 = vmatpush1.msra.mxu0 0.0
    %582 = vmatprep.subr.mxu0 0.0
    %583 = vmatpush1.msra.mxu0 0.0
    %584 = vmatprep.subr.mxu0 0.0
    %585 = vmatpush1.msra.mxu0 0.0
    %586 = vmatprep.subr.mxu0 %v288
    %587 = vmatpush1.msra.mxu0 %v287
    %588 = vmatprep.subr.mxu0 %v286
    %589 = vmatpush1.msra.mxu0 %v285
    %590 = vmatprep.subr.mxu0 0.0
    %591 = vmatpush2.msra.mxu0 0.0
    %592 = vmatprep.subr.mxu0 0.0
    %593 = vmatpush2.msra.mxu0 0.0
    %594 = vmatprep.subr.mxu0 0.0
    %595 = vmatpush2.msra.mxu0 0.0
    %596 = vmatprep.subr.mxu0 0.0
    %597 = vmatpush2.msra.mxu0 0.0
    %598 = vmatprep.subr.mxu0 0.0
    %599 = vmatpush2.msra.mxu0 0.0
    %600 = vmatprep.subr.mxu0 0.0
    %601 = vmatpush2.msra.mxu0 0.0
    %602 = vmatprep.subr.mxu0 0.0
    %603 = vmatpush2.msra.mxu0 0.0
    %604 = vmatprep.subr.mxu0 0.0
    %605 = vmatpush2.msra.mxu0 0.0
    %606 = vmatprep.subr.mxu0 0.0
    %607 = vmatpush2.msra.mxu0 0.0
    %608 = vmatprep.subr.mxu0 0.0
    %609 = vmatpush2.msra.mxu0 0.0
    %610 = vmatprep.subr.mxu0 0.0
    %611 = vmatpush2.msra.mxu0 0.0
    %612 = vmatprep.subr.mxu0 0.0
    %613 = vmatpush2.msra.mxu0 0.0
    %614 = vmatprep.subr.mxu0 0.0
    %615 = vmatpush2.msra.mxu0 0.0
    %616 = vmatprep.subr.mxu0 0.0
    %617 = vmatpush2.msra.mxu0 0.0
    %618 = vmatprep.subr.mxu0 0.0
    %619 = vmatpush2.msra.mxu0 0.0
    %620 = vmatprep.subr.mxu0 0.0
    %621 = vmatpush2.msra.mxu0 0.0
    %622 = vmatprep.mubr.f32.mxu0 0.0
    %623 = vmatmul.mubr.f32.gmra.mxu0 %v343
    %v624 = vpop.f32.mrf.mxu0
    %v625 = vadd.f32 %v554, %v624
    %v626 = vpop.f32.mrf.mxu0
    %v627 = vadd.f32 %v556, %v626
    %628 = vdwg.mxu0
    %v629 = vmax.f32 %v625, 0.0
    %v630 = vmax.f32 %v627, 0.0
    %v631 = vld [vmem:[#allocation8] sm:$0xff]
    %v632 = vld [vmem:[#allocation8 + $0x8] sm:$0xff]
    %v633 = vld [vmem:[#allocation8 + $0x10] sm:$0xff]
    %v634 = vld [vmem:[#allocation8 + $0x18] sm:$0xff]
    %v635 = vld [vmem:[#allocation8 + $0x20] sm:$0xff]
    %v636 = vld [vmem:[#allocation8 + $0x28] sm:$0xff]
    %v637 = vld [vmem:[#allocation8 + $0x30] sm:$0xff]
    %v638 = vld [vmem:[#allocation8 + $0x38] sm:$0xff]
    %v639 = vld [vmem:[#allocation8 + $0x40] sm:$0xff]
    %v640 = vld [vmem:[#allocation8 + $0x48] sm:$0xff]
    %v641 = vld [vmem:[#allocation8 + $0x50] sm:$0xff]
    %v642 = vld [vmem:[#allocation8 + $0x58] sm:$0xff]
    %v643 = vld [vmem:[#allocation8 + $0x60] sm:$0xff]
    %v644 = vld [vmem:[#allocation8 + $0x68] sm:$0xff]
    %v645 = vld [vmem:[#allocation8 + $0x70] sm:$0xff]
    %v646 = vld [vmem:[#allocation8 + $0x78] sm:$0xff]
    %v647 = vld [vmem:[#allocation8 + $0x80] sm:$0xff]
    %v648 = vld [vmem:[#allocation8 + $0x88] sm:$0xff]
    %v649 = vld [vmem:[#allocation8 + $0x90] sm:$0xff]
    %v650 = vld [vmem:[#allocation8 + $0x98] sm:$0xff]
    %v651 = vld [vmem:[#allocation8 + $0xa0] sm:$0xff]
    %v652 = vld [vmem:[#allocation8 + $0xa8] sm:$0xff]
    %v653 = vld [vmem:[#allocation8 + $0xb0] sm:$0xff]
    %v654 = vld [vmem:[#allocation8 + $0xb8] sm:$0xff]
    %v655 = vld [vmem:[#allocation8 + $0xc0] sm:$0xff]
    %v656 = vld [vmem:[#allocation8 + $0xc8] sm:$0xff]
    %v657 = vld [vmem:[#allocation8 + $0xd0] sm:$0xff]
    %v658 = vld [vmem:[#allocation8 + $0xd8] sm:$0xff]
    %v659 = vld [vmem:[#allocation8 + $0xe0] sm:$0xff]
    %v660 = vld [vmem:[#allocation8 + $0xe8] sm:$0xff]
    %v661 = vld [vmem:[#allocation8 + $0xf0] sm:$0xff]
    %v662 = vld [vmem:[#allocation8 + $0xf8] sm:$0xff]
    %v663 = vld [vmem:[%s4] sm:$0x1]
    %v665 = vlaneseq
    %v666 = vshrl.u32 %v665, 7
    %v667 = vsub.s32 0, %v666
    %v668 = vrot.slane %v663, %v667
    %670 = vmatprep.subr.mxu0 0.0
    %671 = vmatpush1.msra.mxu0 %v646
    %672 = vmatprep.subr.mxu0 0.0
    %673 = vmatpush1.msra.mxu0 %v645
    %674 = vmatprep.subr.mxu0 0.0
    %675 = vmatpush1.msra.mxu0 %v644
    %676 = vmatprep.subr.mxu0 0.0
    %677 = vmatpush1.msra.mxu0 %v643
    %678 = vmatprep.subr.mxu0 0.0
    %679 = vmatpush1.msra.mxu0 %v642
    %680 = vmatprep.subr.mxu0 0.0
    %681 = vmatpush1.msra.mxu0 %v641
    %682 = vmatprep.subr.mxu0 0.0
    %683 = vmatpush1.msra.mxu0 %v640
    %684 = vmatprep.subr.mxu0 0.0
    %685 = vmatpush1.msra.mxu0 %v639
    %686 = vmatprep.subr.mxu0 0.0
    %687 = vmatpush1.msra.mxu0 %v638
    %688 = vmatprep.subr.mxu0 0.0
    %689 = vmatpush1.msra.mxu0 %v637
    %690 = vmatprep.subr.mxu0 0.0
    %691 = vmatpush1.msra.mxu0 %v636
    %692 = vmatprep.subr.mxu0 0.0
    %693 = vmatpush1.msra.mxu0 %v635
    %694 = vmatprep.subr.mxu0 0.0
    %695 = vmatpush1.msra.mxu0 %v634
    %696 = vmatprep.subr.mxu0 0.0
    %697 = vmatpush1.msra.mxu0 %v633
    %698 = vmatprep.subr.mxu0 0.0
    %699 = vmatpush1.msra.mxu0 %v632
    %700 = vmatprep.subr.mxu0 0.0
    %701 = vmatpush1.msra.mxu0 %v631
    %702 = vmatprep.subr.mxu0 0.0
    %703 = vmatpush2.msra.mxu0 %v662
    %704 = vmatprep.subr.mxu0 0.0
    %705 = vmatpush2.msra.mxu0 %v661
    %706 = vmatprep.subr.mxu0 0.0
    %707 = vmatpush2.msra.mxu0 %v660
    %708 = vmatprep.subr.mxu0 0.0
    %709 = vmatpush2.msra.mxu0 %v659
    %710 = vmatprep.subr.mxu0 0.0
    %711 = vmatpush2.msra.mxu0 %v658
    %712 = vmatprep.subr.mxu0 0.0
    %713 = vmatpush2.msra.mxu0 %v657
    %714 = vmatprep.subr.mxu0 0.0
    %715 = vmatpush2.msra.mxu0 %v656
    %716 = vmatprep.subr.mxu0 0.0
    %717 = vmatpush2.msra.mxu0 %v655
    %718 = vmatprep.subr.mxu0 0.0
    %719 = vmatpush2.msra.mxu0 %v654
    %720 = vmatprep.subr.mxu0 0.0
    %721 = vmatpush2.msra.mxu0 %v653
    %722 = vmatprep.subr.mxu0 0.0
    %723 = vmatpush2.msra.mxu0 %v652
    %724 = vmatprep.subr.mxu0 0.0
    %725 = vmatpush2.msra.mxu0 %v651
    %726 = vmatprep.subr.mxu0 0.0
    %727 = vmatpush2.msra.mxu0 %v650
    %728 = vmatprep.subr.mxu0 0.0
    %729 = vmatpush2.msra.mxu0 %v649
    %730 = vmatprep.subr.mxu0 0.0
    %731 = vmatpush2.msra.mxu0 %v648
    %732 = vmatprep.subr.mxu0 0.0
    %733 = vmatpush2.msra.mxu0 %v647
    %734 = vmatprep.mubr.f32.mxu0 %v630
    %735 = vmatmul.mubr.f32.gmra.mxu0 %v629
    %v736 = vpop.f32.mrf.mxu0
    %v737 = vadd.f32 %v668, %v736
    %v738 = vpop.f32.mrf.mxu0
    %739 = vdwg.mxu0
    %v740 = vmax.f32 %v737, 0.0
    %v741 = vld [vmem:[#allocation10] sm:$0xff]
    %v742 = vld [vmem:[#allocation10 + $0x8] sm:$0xff]
    %v743 = vld [vmem:[#allocation10 + $0x10] sm:$0xff]
    %v744 = vld [vmem:[#allocation10 + $0x18] sm:$0xff]
    %v745 = vld [vmem:[#allocation10 + $0x20] sm:$0xff]
    %v746 = vld [vmem:[#allocation10 + $0x28] sm:$0xff]
    %v747 = vld [vmem:[#allocation10 + $0x30] sm:$0xff]
    %v748 = vld [vmem:[#allocation10 + $0x38] sm:$0xff]
    %v749 = vld [vmem:[#allocation10 + $0x40] sm:$0xff]
    %v750 = vld [vmem:[#allocation10 + $0x48] sm:$0xff]
    %v751 = vld [vmem:[#allocation10 + $0x50] sm:$0xff]
    %v752 = vld [vmem:[#allocation10 + $0x58] sm:$0xff]
    %v753 = vld [vmem:[#allocation10 + $0x60] sm:$0xff]
    %v754 = vld [vmem:[#allocation10 + $0x68] sm:$0xff]
    %v755 = vld [vmem:[#allocation10 + $0x70] sm:$0xff]
    %v756 = vld [vmem:[#allocation10 + $0x78] sm:$0xff]
    %v757 = vld [vmem:[%s6] sm:$0x1]
    %v759 = vlaneseq
    %v760 = vshrl.u32 %v759, 7
    %v761 = vsub.s32 0, %v760
    %v762 = vrot.slane %v757, %v761
    %764 = vmatprep.subr.mxu0 0.0
    %765 = vmatpush1.msra.mxu0 %v756
    %766 = vmatprep.subr.mxu0 0.0
    %767 = vmatpush1.msra.mxu0 %v755
    %768 = vmatprep.subr.mxu0 0.0
    %769 = vmatpush1.msra.mxu0 %v754
    %770 = vmatprep.subr.mxu0 0.0
    %771 = vmatpush1.msra.mxu0 %v753
    %772 = vmatprep.subr.mxu0 0.0
    %773 = vmatpush1.msra.mxu0 %v752
    %774 = vmatprep.subr.mxu0 0.0
    %775 = vmatpush1.msra.mxu0 %v751
    %776 = vmatprep.subr.mxu0 0.0
    %777 = vmatpush1.msra.mxu0 %v750
    %778 = vmatprep.subr.mxu0 0.0
    %779 = vmatpush1.msra.mxu0 %v749
    %780 = vmatprep.subr.mxu0 0.0
    %781 = vmatpush1.msra.mxu0 %v748
    %782 = vmatprep.subr.mxu0 0.0
    %783 = vmatpush1.msra.mxu0 %v747
    %784 = vmatprep.subr.mxu0 0.0
    %785 = vmatpush1.msra.mxu0 %v746
    %786 = vmatprep.subr.mxu0 0.0
    %787 = vmatpush1.msra.mxu0 %v745
    %788 = vmatprep.subr.mxu0 0.0
    %789 = vmatpush1.msra.mxu0 %v744
    %790 = vmatprep.subr.mxu0 0.0
    %791 = vmatpush1.msra.mxu0 %v743
    %792 = vmatprep.subr.mxu0 0.0
    %793 = vmatpush1.msra.mxu0 %v742
    %794 = vmatprep.subr.mxu0 0.0
    %795 = vmatpush1.msra.mxu0 %v741
    %796 = vmatprep.subr.mxu0 0.0
    %797 = vmatpush2.msra.mxu0 0.0
    %798 = vmatprep.subr.mxu0 0.0
    %799 = vmatpush2.msra.mxu0 0.0
    %800 = vmatprep.subr.mxu0 0.0
    %801 = vmatpush2.msra.mxu0 0.0
    %802 = vmatprep.subr.mxu0 0.0
    %803 = vmatpush2.msra.mxu0 0.0
    %804 = vmatprep.subr.mxu0 0.0
    %805 = vmatpush2.msra.mxu0 0.0
    %806 = vmatprep.subr.mxu0 0.0
    %807 = vmatpush2.msra.mxu0 0.0
    %808 = vmatprep.subr.mxu0 0.0
    %809 = vmatpush2.msra.mxu0 0.0
    %810 = vmatprep.subr.mxu0 0.0
    %811 = vmatpush2.msra.mxu0 0.0
    %812 = vmatprep.subr.mxu0 0.0
    %813 = vmatpush2.msra.mxu0 0.0
    %814 = vmatprep.subr.mxu0 0.0
    %815 = vmatpush2.msra.mxu0 0.0
    %816 = vmatprep.subr.mxu0 0.0
    %817 = vmatpush2.msra.mxu0 0.0
    %818 = vmatprep.subr.mxu0 0.0
    %819 = vmatpush2.msra.mxu0 0.0
    %820 = vmatprep.subr.mxu0 0.0
    %821 = vmatpush2.msra.mxu0 0.0
    %822 = vmatprep.subr.mxu0 0.0
    %823 = vmatpush2.msra.mxu0 0.0
    %824 = vmatprep.subr.mxu0 0.0
    %825 = vmatpush2.msra.mxu0 0.0
    %826 = vmatprep.subr.mxu0 0.0
    %827 = vmatpush2.msra.mxu0 0.0
    %828 = vmatprep.mubr.f32.mxu0 0.0
    %829 = vmatmul.mubr.f32.gmra.mxu0 %v740
    %v830 = vpop.f32.mrf.mxu0
    %v831 = vadd.f32 %v762, %v830
    %v832 = vpop.f32.mrf.mxu0
    %833 = vdwg.mxu0
    %v834 = vlaneseq
    %v835 = vand.u32 %v834, 127
    %vm836 = vcmp.lt.s32.totalorder %v835, 10
    %v837 = vsel %vm836, %v831, -1e+30
    %vm838 = vcmask 1041408
    %v839 = vsel %vm838, %v837, -inf
    %840 = vmax.xlane.f32.xlu0 %v839
    %v841 = vpop.xlane.xlu0 %840
    %v842 = vsub.f32 %v837, %v841
    %v843 = vmul.f32 %v842, 1.442695
    %v844 = vpow.pop %v843
    %v845 = vsel %vm838, %v844, 0.0
    %846 = vadd.xlane.f32.xlu0 %v845
    %v847 = vpop.xlane.xlu0 %846
    %v848 = vrcp.pop %v847
    %v849 = vmul.f32 %v844, %v848
    %vm850 = vcmask 74752
    %851 = vst.msk [vmem:[#allocation11] sm:$0x3] %vm850, %v849
    // Predicated region
    $region50: #{mlp_forward.1} parent=1 // pred_check
      _
    $region51: #{mlp_forward.1} parent=1 // pred_check_branch
      %853 = sbr.rel (0) target = $region53
    $region52: #{mlp_forward.1} parent=1 // pred_region
      %s855 = ssub.s32 32, 32
      %856 = vsyncadd [#allocation4], %s855
      %s858 = sshll.u32 [#allocation11], 4
      %s859 = int_to_ptr.vmem [resolvable:$true] %s858
      %861 = dma.vmem_to_hbm [thread:$0]  %s859, 32, %s7, [#allocation4]
    $region53: #{mlp_forward.1} parent=1 // pred_fallthru
      _
    // Predicated region
    $region54: #{mlp_forward.1} parent=1 // pred_check
      _
    $region55: #{mlp_forward.1} parent=1 // pred_check_branch
      %863 = sbr.rel (0) target = $region57
    $region56: #{mlp_forward.1} parent=1 // pred_region
      %864 = dma.done [#allocation4], 32
    $region57: #{mlp_forward.1} parent=1 // pred_fallthru
      _
    %865 = vsyncpa [#allocation3], 1
    %866 = vsyncpa [#allocation6], 1
    %867 = vsyncpa [#allocation9], 1
    %868 = vsyncpa [#allocation4], 1

</llo_original>
